<compile_context>
chip_gen: v7x
topology: tpu7x:2x2x1
jax: 0.10.0
libtpu: 0.0.40
codegen_flags: <defaults>
</compile_context>

<pallas_src>
import jax
import jax.numpy as jnp
from jax.experimental import pallas as pl
from jax.experimental.pallas import tpu as pltpu

HIDDEN = 64  # width of the two ReLU'd layers (fixed by the module)


def ae_kernel(x_ref, w1_ref, b1_ref, w23_ref, b23_ref, w4_ref, b4_ref, out_ref):
    x = x_ref[...]                                             # (TILE_B, D_pad) bf16

    # encoder layer 1 + ReLU   (D_pad -> 64)
    h = jnp.dot(x, w1_ref[...], preferred_element_type=jnp.float32) + b1_ref[...]
    h = jnp.maximum(h, 0.0)

    # folded bottleneck 64 -> 16 -> 64 (no nonlinearity in between) + ReLU
    g = jnp.dot(h.astype(jnp.bfloat16), w23_ref[...],
                preferred_element_type=jnp.float32) + b23_ref[...]
    g = jnp.maximum(g, 0.0)

    # decoder output layer     (64 -> D_pad)
    y = jnp.dot(g.astype(jnp.bfloat16), w4_ref[...],
                preferred_element_type=jnp.float32) + b4_ref[...]

    out_ref[...] = y.astype(out_ref.dtype)


def _vmem_bytes(tile_b, d_pad, hidden=HIDDEN):
    """Rough VMEM footprint estimate for picking tile_b / vmem_limit_bytes."""
    x_tile = tile_b * d_pad * 2            # bf16 input tile
    out_tile = tile_b * d_pad * 4          # f32 output tile
    w_bytes = (d_pad * hidden + hidden * hidden + hidden * d_pad) * 2
    b_bytes = (hidden + hidden + d_pad) * 4
    # inputs/outputs are double-buffered by the Pallas pipeline
    return 2 * (x_tile + out_tile) + 2 * (w_bytes + b_bytes)


def prepare_params(params, d_pad):
    """Fold the linear bottleneck, pad the feature dim, cast weights to bf16."""
    w1, b1, w2, b2, w3, b3, w4, b4 = params
    d = w1.shape[0]
    pad = d_pad - d
    w23 = w2 @ w3                          # (64, 64)   Lin(64,16) o Lin(16,64)
    b23 = b2 @ w3 + b3                     # (1, 64)
    w1p = jnp.pad(w1, ((0, pad), (0, 0)))  # zero rows: padded x lanes contribute 0
    w4p = jnp.pad(w4, ((0, 0), (0, pad)))  # zero cols: padded output lanes are 0
    b4p = jnp.pad(b4, ((0, 0), (0, pad)))
    return (w1p.astype(jnp.bfloat16), b1.astype(jnp.float32),
            w23.astype(jnp.bfloat16), b23.astype(jnp.float32),
            w4p.astype(jnp.bfloat16), b4p.astype(jnp.float32))


def ae_forward(x, params, *, tile_b=256):
    B, D = x.shape
    H = HIDDEN
    d_pad = ((D + 127) // 128) * 128       # lane-dense feature dim

    # batch tile: multiple of 16 (bf16 sublane pack), moderate size, and sized
    # against the tightest VMEM budget (v7x: 64 MiB physical).
    tile_b = min(tile_b, ((B + 15) // 16) * 16)
    tile_b = max(16, (tile_b // 16) * 16)
    while tile_b > 16 and _vmem_bytes(tile_b, d_pad) > (40 << 20):
        tile_b //= 2
    b_pad = pl.cdiv(B, tile_b) * tile_b

    w1, b1, w23, b23, w4, b4 = prepare_params(params, d_pad)
    xp = jnp.pad(x, ((0, b_pad - B), (0, d_pad - D))).astype(jnp.bfloat16)

    vmem_limit = int(min(max(_vmem_bytes(tile_b, d_pad) + (4 << 20), 16 << 20),
                         48 << 20))

    out = pl.pallas_call(
        ae_kernel,
        out_shape=jax.ShapeDtypeStruct((b_pad, d_pad), jnp.float32),
        grid=(b_pad // tile_b,),
        in_specs=[
            pl.BlockSpec((tile_b, d_pad), lambda i: (i, 0)),   # x tile (streamed)
            pl.BlockSpec((d_pad, H), lambda i: (0, 0)),        # w1   (VMEM-resident)
            pl.BlockSpec((1, H), lambda i: (0, 0)),            # b1
            pl.BlockSpec((H, H), lambda i: (0, 0)),            # w23 = w2 @ w3
            pl.BlockSpec((1, H), lambda i: (0, 0)),            # b23
            pl.BlockSpec((H, d_pad), lambda i: (0, 0)),        # w4
            pl.BlockSpec((1, d_pad), lambda i: (0, 0)),        # b4
        ],
        out_specs=pl.BlockSpec((tile_b, d_pad), lambda i: (i, 0)),
        compiler_params=pltpu.CompilerParams(
            dimension_semantics=("parallel",),   # shard batch tiles over v7x's 2 TCs
            vmem_limit_bytes=vmem_limit,
        ),
    )(xp, w1, b1, w23, b23, w4, b4)

    return out[:B, :D]


def init_params(key, input_dim):
    """Deterministic init mimicking PyTorch's default Linear init
    (uniform in +/-1/sqrt(fan_in)), weights stored as (in, out), f32."""
    dims = [(input_dim, 64), (64, 16), (16, 64), (64, input_dim)]
    params = []
    for i, (fan_in, fan_out) in enumerate(dims):
        kw, kb = jax.random.split(jax.random.fold_in(key, i))
        bound = 1.0 / (fan_in ** 0.5)
        w = jax.random.uniform(kw, (fan_in, fan_out), jnp.float32, -bound, bound)
        b = jax.random.uniform(kb, (1, fan_out), jnp.float32, -bound, bound)
        params += [w, b]
    return tuple(params)


def ae_reference(x, params):
    """Pure-JAX f32 reference of the original (unfolded) module."""
    (w1, b1, w2, b2, w3, b3, w4, b4) = params
    h = jnp.maximum(x @ w1 + b1, 0.0)
    z = h @ w2 + b2
    g = jnp.maximum(z @ w3 + b3, 0.0)
    return g @ w4 + b4


if __name__ == "__main__":
    key = jax.random.PRNGKey(0)
    batch, input_dim = 512, 32            # grid of 2 batch tiles at tile_b=256

    kx, kp = jax.random.split(key)
    x = jax.random.normal(kx, (batch, input_dim), jnp.float32)
    params = init_params(kp, input_dim)

    out = ae_forward(x, params)
    jax.block_until_ready(out)

    ref = ae_reference(x, params)
    assert out.shape == (batch, input_dim)
    # bf16 MXU operands (f32 accumulate) + folded bottleneck => loose tolerance
    max_err = float(jnp.max(jnp.abs(out - ref)))
    assert jnp.allclose(out, ref, atol=3e-2, rtol=3e-2), max_err

    print("KERNEL_OK")
</pallas_src>

<mosaic_0001>
module attributes {stable_mosaic.version = 11 : i64} {
  func.func @ae_kernel(%arg0: i32, %arg1: memref<256x128xbf16, #tpu.memory_space<vmem>>, %arg2: memref<128x64xbf16, #tpu.memory_space<vmem>>, %arg3: memref<1x64xf32, #tpu.memory_space<vmem>>, %arg4: memref<64x64xbf16, #tpu.memory_space<vmem>>, %arg5: memref<1x64xf32, #tpu.memory_space<vmem>>, %arg6: memref<64x128xbf16, #tpu.memory_space<vmem>>, %arg7: memref<1x128xf32, #tpu.memory_space<vmem>>, %arg8: memref<256x128xf32, #tpu.memory_space<vmem>>) attributes {dimension_semantics = [#tpu.dimension_semantics<parallel>], iteration_bounds = array<i64: 2>, scalar_prefetch = 0 : i64, scratch_operands = 0 : i64, tpu.core_type = #tpu.core_type<tc>, window_params = [{transform_indices = @transform_0, window_bounds = array<i64: 256, 128>}, {pipeline_mode = #tpu.pipeline_mode<synchronous>, transform_indices = @transform_1, window_bounds = array<i64: 128, 64>}, {pipeline_mode = #tpu.pipeline_mode<synchronous>, transform_indices = @transform_2, window_bounds = array<i64: 1, 64>}, {pipeline_mode = #tpu.pipeline_mode<synchronous>, transform_indices = @transform_3, window_bounds = array<i64: 64, 64>}, {pipeline_mode = #tpu.pipeline_mode<synchronous>, transform_indices = @transform_4, window_bounds = array<i64: 1, 64>}, {pipeline_mode = #tpu.pipeline_mode<synchronous>, transform_indices = @transform_5, window_bounds = array<i64: 64, 128>}, {pipeline_mode = #tpu.pipeline_mode<synchronous>, transform_indices = @transform_6, window_bounds = array<i64: 1, 128>}, {transform_indices = @transform_7, window_bounds = array<i64: 256, 128>}]} {
    %c0 = arith.constant 0 : index
    %c0_0 = arith.constant 0 : index
    %0 = vector.load %arg1[%c0, %c0_0] : memref<256x128xbf16, #tpu.memory_space<vmem>>, vector<256x128xbf16>
    %c0_1 = arith.constant 0 : index
    %c0_2 = arith.constant 0 : index
    %1 = vector.load %arg2[%c0_1, %c0_2] : memref<128x64xbf16, #tpu.memory_space<vmem>>, vector<128x64xbf16>
    %cst = arith.constant dense<0.000000e+00> : vector<256x64xf32>
    %2 = tpu.matmul %0, %1, %cst {dimension_numbers = #tpu.dot_dimension_numbers<[1], [0], [0], [1], [0, 0, 1, 1], [], []>} : vector<256x128xbf16>, vector<128x64xbf16>, vector<256x64xf32> -> vector<256x64xf32>
    %c0_3 = arith.constant 0 : index
    %c0_4 = arith.constant 0 : index
    %3 = vector.load %arg3[%c0_3, %c0_4] : memref<1x64xf32, #tpu.memory_space<vmem>>, vector<1x64xf32>
    %4 = vector.broadcast %3 : vector<1x64xf32> to vector<256x64xf32>
    %5 = arith.addf %2, %4 : vector<256x64xf32>
    %cst_5 = arith.constant 0.000000e+00 : f32
    %6 = vector.broadcast %cst_5 : f32 to vector<256x64xf32>
    %7 = arith.maximumf %5, %6 : vector<256x64xf32>
    %8 = arith.truncf %7 : vector<256x64xf32> to vector<256x64xbf16>
    %c0_6 = arith.constant 0 : index
    %c0_7 = arith.constant 0 : index
    %9 = vector.load %arg4[%c0_6, %c0_7] : memref<64x64xbf16, #tpu.memory_space<vmem>>, vector<64x64xbf16>
    %cst_8 = arith.constant dense<0.000000e+00> : vector<256x64xf32>
    %10 = tpu.matmul %8, %9, %cst_8 {dimension_numbers = #tpu.dot_dimension_numbers<[1], [0], [0], [1], [0, 0, 1, 1], [], []>} : vector<256x64xbf16>, vector<64x64xbf16>, vector<256x64xf32> -> vector<256x64xf32>
    %c0_9 = arith.constant 0 : index
    %c0_10 = arith.constant 0 : index
    %11 = vector.load %arg5[%c0_9, %c0_10] : memref<1x64xf32, #tpu.memory_space<vmem>>, vector<1x64xf32>
    %12 = vector.broadcast %11 : vector<1x64xf32> to vector<256x64xf32>
    %13 = arith.addf %10, %12 : vector<256x64xf32>
    %cst_11 = arith.constant 0.000000e+00 : f32
    %14 = vector.broadcast %cst_11 : f32 to vector<256x64xf32>
    %15 = arith.maximumf %13, %14 : vector<256x64xf32>
    %16 = arith.truncf %15 : vector<256x64xf32> to vector<256x64xbf16>
    %c0_12 = arith.constant 0 : index
    %c0_13 = arith.constant 0 : index
    %17 = vector.load %arg6[%c0_12, %c0_13] : memref<64x128xbf16, #tpu.memory_space<vmem>>, vector<64x128xbf16>
    %cst_14 = arith.constant dense<0.000000e+00> : vector<256x128xf32>
    %18 = tpu.matmul %16, %17, %cst_14 {dimension_numbers = #tpu.dot_dimension_numbers<[1], [0], [0], [1], [0, 0, 1, 1], [], []>} : vector<256x64xbf16>, vector<64x128xbf16>, vector<256x128xf32> -> vector<256x128xf32>
    %c0_15 = arith.constant 0 : index
    %c0_16 = arith.constant 0 : index
    %19 = vector.load %arg7[%c0_15, %c0_16] : memref<1x128xf32, #tpu.memory_space<vmem>>, vector<1x128xf32>
    %20 = vector.broadcast %19 : vector<1x128xf32> to vector<256x128xf32>
    %21 = arith.addf %18, %20 : vector<256x128xf32>
    %c0_17 = arith.constant 0 : index
    %c0_18 = arith.constant 0 : index
    %22 = vector.load %arg8[%c0_17, %c0_18] : memref<256x128xf32, #tpu.memory_space<vmem>>, vector<256x128xf32>
    tpu.vector_store %arg8[%c0_17, %c0_18], %21 {strides = array<i32>} : memref<256x128xf32, #tpu.memory_space<vmem>>, vector<256x128xf32>,
    return
  }
  func.func @transform_0(%arg0: i32) -> (i32, i32) {
    %c0_i32 = arith.constant 0 : i32
    %c0_i32_0 = arith.constant 0 : i32
    return %arg0, %c0_i32 : i32, i32
  }
  func.func @transform_1(%arg0: i32) -> (i32, i32) {
    %c0_i32 = arith.constant 0 : i32
    %c0_i32_0 = arith.constant 0 : i32
    %c0_i32_1 = arith.constant 0 : i32
    return %c0_i32, %c0_i32_0 : i32, i32
  }
  func.func @transform_2(%arg0: i32) -> (i32, i32) {
    %c0_i32 = arith.constant 0 : i32
    %c0_i32_0 = arith.constant 0 : i32
    %c0_i32_1 = arith.constant 0 : i32
    return %c0_i32, %c0_i32_0 : i32, i32
  }
  func.func @transform_3(%arg0: i32) -> (i32, i32) {
    %c0_i32 = arith.constant 0 : i32
    %c0_i32_0 = arith.constant 0 : i32
    %c0_i32_1 = arith.constant 0 : i32
    return %c0_i32, %c0_i32_0 : i32, i32
  }
  func.func @transform_4(%arg0: i32) -> (i32, i32) {
    %c0_i32 = arith.constant 0 : i32
    %c0_i32_0 = arith.constant 0 : i32
    %c0_i32_1 = arith.constant 0 : i32
    return %c0_i32, %c0_i32_0 : i32, i32
  }
  func.func @transform_5(%arg0: i32) -> (i32, i32) {
    %c0_i32 = arith.constant 0 : i32
    %c0_i32_0 = arith.constant 0 : i32
    %c0_i32_1 = arith.constant 0 : i32
    return %c0_i32, %c0_i32_0 : i32, i32
  }
  func.func @transform_6(%arg0: i32) -> (i32, i32) {
    %c0_i32 = arith.constant 0 : i32
    %c0_i32_0 = arith.constant 0 : i32
    %c0_i32_1 = arith.constant 0 : i32
    return %c0_i32, %c0_i32_0 : i32, i32
  }
  func.func @transform_7(%arg0: i32) -> (i32, i32) {
    %c0_i32 = arith.constant 0 : i32
    %c0_i32_0 = arith.constant 0 : i32
    return %arg0, %c0_i32 : i32, i32
  }
}

</mosaic_0001>

<llo_original>
// kernel: tpu_custom_call.1
$region0: #{tpu_custom_call.1}
  #allocation0 [shape = 'u32[]', space=smem, size = 0x4, offset = 0x4, fixed_abs, tag = 'smem constant byte address 0x4 - core index']
  #allocation1 [shape = 'u32[144,128]{1,0:T(1,128)}', space=vmem, size = 0x12000, scoped, tag = 'internal scratch']
  %s0 = inlined_call_operand.hbm [shape: bf16[512,128], index: 0, kind: input, shape index: {}]
  %s1 = inlined_call_operand.vmem [shape: bf16[128,64], index: 1, kind: input, shape index: {}]
  %s2 = inlined_call_operand.vmem [shape: f32[1,64], index: 2, kind: input, shape index: {}]
  %s3 = inlined_call_operand.vmem [shape: bf16[64,64], index: 3, kind: input, shape index: {}]
  %s4 = inlined_call_operand.vmem [shape: f32[1,64], index: 4, kind: input, shape index: {}]
  %s5 = inlined_call_operand.vmem [shape: bf16[64,128], index: 5, kind: input, shape index: {}]
  %s6 = inlined_call_operand.vmem [shape: f32[1,128], index: 6, kind: input, shape index: {}]
  %s7 = inlined_call_operand.hbm [shape: f32[512,128], index: 7, kind: output, shape index: {}]
  %s8 = sld [smem:[#allocation0]]
  $region65: #{tpu_custom_call.1} parent=0
    _
  %s10 = ssub.s32 1, %s8
  %s11 = scalar_select 0, %s10, %s8
  $region1: #{tpu_custom_call.1} parent=0
    #allocation2 [shape = 'u8[131072]{0}', space=vmem, size = 0x20000, scoped, tag = 'input window, operand 0']
    #allocation3 [shape = 's32[2]{0}', space=sflag, size = 0x8, scoped, tag = 'scoped memory for tpu_custom_call.1']
    #allocation4 [shape = 's32[2]{0}', space=sflag, size = 0x8, scoped, tag = 'scoped memory for tpu_custom_call.1']
    #allocation5 [shape = 'u8[262144]{0}', space=vmem, size = 0x40000, scoped, tag = 'output window, operand 0']
    %12 = vsyncpa [#allocation3], 0
    %s13 = scalar_lea.sflag [#allocation3], 1
    %14 = vsyncpa %s13, 0
    %15 = vsyncpa [#allocation4], 0
    %s16 = scalar_lea.sflag [#allocation4], 1
    %17 = vsyncpa %s16, 0
    loop: start=0, step=1, limit=4
    $region2: #{tpu_custom_call.1} parent=1 // loop_pre_header
      _
    $region3: #{tpu_custom_call.1} parent=1 // loop_header
      %s19 = sphi 0, %s23
      %p20 = scmp.ge.s32.totalorder %s19, 4
      %s29 = sphi 0, %s31
      %s32 = sphi 0, %s29
      %s33 = sphi 0, %s32
      %s49 = sphi 0, %s33
      %s53 = sphi 0, %s53
      %s55 = sphi 0, %s53
      %s56 = sphi 0, %s55
      %s70 = sphi 0, %s56
      %s74 = sphi 0, %s74
      %s76 = sphi 0, %s74
      %s77 = sphi 0, %s76
      %s91 = sphi 0, %s77
      %s95 = sphi 0, %s95
      %s97 = sphi 0, %s95
      %s98 = sphi 0, %s97
      %s112 = sphi 0, %s98
      %s116 = sphi 0, %s116
      %s118 = sphi 0, %s116
      %s119 = sphi 0, %s118
      %s133 = sphi 0, %s119
      %s137 = sphi 0, %s137
      %s139 = sphi 0, %s137
      %s140 = sphi 0, %s139
      %s154 = sphi 0, %s140
      %s158 = sphi 0, %s158
      %s160 = sphi 0, %s158
      %s161 = sphi 0, %s160
      %s175 = sphi 0, %s161
      %s181 = sphi 0, %s183
      %s184 = sphi 0, %s181
      %s185 = sphi 0, %s184
      %s201 = sphi 0, %s185
    $region4: #{tpu_custom_call.1} parent=1 // loop_header_branch
      %22 = sbr.rel (%p20) target = $region8
    $region5: #{tpu_custom_call.1} parent=1 // loop_body
      %s24 = ssub.s32 %s19, 1
      %s25 = ssub.s32 %s19, 2
      %s26 = sadd.s32 %s19, 1
      %s27 = ssub.s32 %s19, %s26
      %p28 = scmp.eq.s32.totalorder %s27, 0
      %s30 = sadd.s32 %s29, 1
      %s31 = scalar_select %p28, %s29, %s30
      %p34 = pneg %p28
      %p35 = scmp.eq.s32.totalorder %s19, 1
      %p36 = por %p34, %p35
      %p37 = scmp.ne.s32.totalorder %s29, %s32
      %p38 = scmp.eq.s32.totalorder %s19, 0
      %p39 = por %p37, %p38
      %p40 = scmp.ne.s32.totalorder %s29, %s32
      %p41 = scmp.eq.s32.totalorder %s24, 1
      %p42 = por %p40, %p41
      %p43 = scmp.ne.s32.totalorder %s32, %s33
      %p44 = scmp.eq.s32.totalorder %s24, 0
      %p45 = por %p43, %p44
      %p46 = scmp.ne.s32.totalorder %s32, %s33
      %p47 = scmp.eq.s32.totalorder %s25, 1
      %p48 = por %p46, %p47
      %p50 = scmp.ne.s32.totalorder %s33, %s49
      %p51 = scmp.eq.s32.totalorder %s25, 0
      %p52 = por %p50, %p51
      %s54 = sadd.s32 %s53, 1
      %p57 = scmp.eq.s32.totalorder %s19, 1
      %p58 = scmp.ne.s32.totalorder %s53, %s55
      %p59 = scmp.eq.s32.totalorder %s19, 0
      %p60 = por %p58, %p59
      %p61 = scmp.ne.s32.totalorder %s53, %s55
      %p62 = scmp.eq.s32.totalorder %s24, 1
      %p63 = por %p61, %p62
      %p64 = scmp.ne.s32.totalorder %s55, %s56
      %p65 = scmp.eq.s32.totalorder %s24, 0
      %p66 = por %p64, %p65
      %p67 = scmp.ne.s32.totalorder %s55, %s56
      %p68 = scmp.eq.s32.totalorder %s25, 1
      %p69 = por %p67, %p68
      %p71 = scmp.ne.s32.totalorder %s56, %s70
      %p72 = scmp.eq.s32.totalorder %s25, 0
      %p73 = por %p71, %p72
      %s75 = sadd.s32 %s74, 1
      %p78 = scmp.eq.s32.totalorder %s19, 1
      %p79 = scmp.ne.s32.totalorder %s74, %s76
      %p80 = scmp.eq.s32.totalorder %s19, 0
      %p81 = por %p79, %p80
      %p82 = scmp.ne.s32.totalorder %s74, %s76
      %p83 = scmp.eq.s32.totalorder %s24, 1
      %p84 = por %p82, %p83
      %p85 = scmp.ne.s32.totalorder %s76, %s77
      %p86 = scmp.eq.s32.totalorder %s24, 0
      %p87 = por %p85, %p86
      %p88 = scmp.ne.s32.totalorder %s76, %s77
      %p89 = scmp.eq.s32.totalorder %s25, 1
      %p90 = por %p88, %p89
      %p92 = scmp.ne.s32.totalorder %s77, %s91
      %p93 = scmp.eq.s32.totalorder %s25, 0
      %p94 = por %p92, %p93
      %s96 = sadd.s32 %s95, 1
      %p99 = scmp.eq.s32.totalorder %s19, 1
      %p100 = scmp.ne.s32.totalorder %s95, %s97
      %p101 = scmp.eq.s32.totalorder %s19, 0
      %p102 = por %p100, %p101
      %p103 = scmp.ne.s32.totalorder %s95, %s97
      %p104 = scmp.eq.s32.totalorder %s24, 1
      %p105 = por %p103, %p104
      %p106 = scmp.ne.s32.totalorder %s97, %s98
      %p107 = scmp.eq.s32.totalorder %s24, 0
      %p108 = por %p106, %p107
      %p109 = scmp.ne.s32.totalorder %s97, %s98
      %p110 = scmp.eq.s32.totalorder %s25, 1
      %p111 = por %p109, %p110
      %p113 = scmp.ne.s32.totalorder %s98, %s112
      %p114 = scmp.eq.s32.totalorder %s25, 0
      %p115 = por %p113, %p114
      %s117 = sadd.s32 %s116, 1
      %p120 = scmp.eq.s32.totalorder %s19, 1
      %p121 = scmp.ne.s32.totalorder %s116, %s118
      %p122 = scmp.eq.s32.totalorder %s19, 0
      %p123 = por %p121, %p122
      %p124 = scmp.ne.s32.totalorder %s116, %s118
      %p125 = scmp.eq.s32.totalorder %s24, 1
      %p126 = por %p124, %p125
      %p127 = scmp.ne.s32.totalorder %s118, %s119
      %p128 = scmp.eq.s32.totalorder %s24, 0
      %p129 = por %p127, %p128
      %p130 = scmp.ne.s32.totalorder %s118, %s119
      %p131 = scmp.eq.s32.totalorder %s25, 1
      %p132 = por %p130, %p131
      %p134 = scmp.ne.s32.totalorder %s119, %s133
      %p135 = scmp.eq.s32.totalorder %s25, 0
      %p136 = por %p134, %p135
      %s138 = sadd.s32 %s137, 1
      %p141 = scmp.eq.s32.totalorder %s19, 1
      %p142 = scmp.ne.s32.totalorder %s137, %s139
      %p143 = scmp.eq.s32.totalorder %s19, 0
      %p144 = por %p142, %p143
      %p145 = scmp.ne.s32.totalorder %s137, %s139
      %p146 = scmp.eq.s32.totalorder %s24, 1
      %p147 = por %p145, %p146
      %p148 = scmp.ne.s32.totalorder %s139, %s140
      %p149 = scmp.eq.s32.totalorder %s24, 0
      %p150 = por %p148, %p149
      %p151 = scmp.ne.s32.totalorder %s139, %s140
      %p152 = scmp.eq.s32.totalorder %s25, 1
      %p153 = por %p151, %p152
      %p155 = scmp.ne.s32.totalorder %s140, %s154
      %p156 = scmp.eq.s32.totalorder %s25, 0
      %p157 = por %p155, %p156
      %s159 = sadd.s32 %s158, 1
      %p162 = scmp.eq.s32.totalorder %s19, 1
      %p163 = scmp.ne.s32.totalorder %s158, %s160
      %p164 = scmp.eq.s32.totalorder %s19, 0
      %p165 = por %p163, %p164
      %p166 = scmp.ne.s32.totalorder %s158, %s160
      %p167 = scmp.eq.s32.totalorder %s24, 1
      %p168 = por %p166, %p167
      %p169 = scmp.ne.s32.totalorder %s160, %s161
      %p170 = scmp.eq.s32.totalorder %s24, 0
      %p171 = por %p169, %p170
      %p172 = scmp.ne.s32.totalorder %s160, %s161
      %p173 = scmp.eq.s32.totalorder %s25, 1
      %p174 = por %p172, %p173
      %p176 = scmp.ne.s32.totalorder %s161, %s175
      %p177 = scmp.eq.s32.totalorder %s25, 0
      %p178 = por %p176, %p177
      %s179 = ssub.s32 %s19, %s26
      %p180 = scmp.eq.s32.totalorder %s179, 0
      %s182 = sadd.s32 %s181, 1
      %s183 = scalar_select %p180, %s181, %s182
      %p186 = pneg %p180
      %p187 = scmp.eq.s32.totalorder %s19, 1
      %p188 = por %p186, %p187
      %p189 = scmp.ne.s32.totalorder %s181, %s184
      %p190 = scmp.eq.s32.totalorder %s19, 0
      %p191 = por %p189, %p190
      %p192 = scmp.ne.s32.totalorder %s181, %s184
      %p193 = scmp.eq.s32.totalorder %s24, 1
      %p194 = por %p192, %p193
      %p195 = scmp.ne.s32.totalorder %s184, %s185
      %p196 = scmp.eq.s32.totalorder %s24, 0
      %p197 = por %p195, %p196
      %p198 = scmp.ne.s32.totalorder %s184, %s185
      %p199 = scmp.eq.s32.totalorder %s25, 1
      %p200 = por %p198, %p199
      %p202 = scmp.ne.s32.totalorder %s185, %s201
      %p203 = scmp.eq.s32.totalorder %s25, 0
      %p204 = por %p202, %p203
      %p205 = scmp.le.s32.totalorder 1, %s19
      %p206 = scmp.lt.s32.totalorder %s19, 3
      %p207 = pnand %p205, %p206
      %p208 = pneg %p207
      // Predicated region
      $region9: #{tpu_custom_call.1} parent=5 // pred_check
        _
      $region10: #{tpu_custom_call.1} parent=5 // pred_check_branch
        %210 = sbr.rel (%p207) target = $region12
      $region11: #{tpu_custom_call.1} parent=5 // pred_region
        %s211 = ssub.s32 %s19, 1
        // Predicated region
        $region13: #{tpu_custom_call.1} parent=11 // pred_check
          %p212 = pneg %p66
        $region14: #{tpu_custom_call.1} parent=11 // pred_check_branch
          %214 = sbr.rel (%p212) target = $region16
        $region15: #{tpu_custom_call.1} parent=11 // pred_region
          _
        $region16: #{tpu_custom_call.1} parent=11 // pred_fallthru
          _
        // Predicated region
        $region17: #{tpu_custom_call.1} parent=11 // pred_check
          %p215 = pneg %p87
        $region18: #{tpu_custom_call.1} parent=11 // pred_check_branch
          %217 = sbr.rel (%p215) target = $region20
        $region19: #{tpu_custom_call.1} parent=11 // pred_region
          _
        $region20: #{tpu_custom_call.1} parent=11 // pred_fallthru
          _
        // Predicated region
        $region21: #{tpu_custom_call.1} parent=11 // pred_check
          %p218 = pneg %p108
        $region22: #{tpu_custom_call.1} parent=11 // pred_check_branch
          %220 = sbr.rel (%p218) target = $region24
        $region23: #{tpu_custom_call.1} parent=11 // pred_region
          _
        $region24: #{tpu_custom_call.1} parent=11 // pred_fallthru
          _
        // Predicated region
        $region25: #{tpu_custom_call.1} parent=11 // pred_check
          %p221 = pneg %p129
        $region26: #{tpu_custom_call.1} parent=11 // pred_check_branch
          %223 = sbr.rel (%p221) target = $region28
        $region27: #{tpu_custom_call.1} parent=11 // pred_region
          _
        $region28: #{tpu_custom_call.1} parent=11 // pred_fallthru
          _
        // Predicated region
        $region29: #{tpu_custom_call.1} parent=11 // pred_check
          %p224 = pneg %p150
        $region30: #{tpu_custom_call.1} parent=11 // pred_check_branch
          %226 = sbr.rel (%p224) target = $region32
        $region31: #{tpu_custom_call.1} parent=11 // pred_region
          _
        $region32: #{tpu_custom_call.1} parent=11 // pred_fallthru
          _
        // Predicated region
        $region33: #{tpu_custom_call.1} parent=11 // pred_check
          %p227 = pneg %p171
        $region34: #{tpu_custom_call.1} parent=11 // pred_check_branch
          %229 = sbr.rel (%p227) target = $region36
        $region35: #{tpu_custom_call.1} parent=11 // pred_region
          _
        $region36: #{tpu_custom_call.1} parent=11 // pred_fallthru
          _
      $region12: #{tpu_custom_call.1} parent=5 // pred_fallthru
        _
      %p230 = scmp.lt.s32.totalorder %s19, 2
      // Predicated region
      $region37: #{tpu_custom_call.1} parent=5 // pred_check
        %p231 = pneg %p230
      $region38: #{tpu_custom_call.1} parent=5 // pred_check_branch
        %233 = sbr.rel (%p231) target = $region40
      $region39: #{tpu_custom_call.1} parent=5 // pred_region
        // Predicated region
        $region41: #{tpu_custom_call.1} parent=39 // pred_check
          %p234 = pneg %p39
        $region42: #{tpu_custom_call.1} parent=39 // pred_check_branch
          %236 = sbr.rel (%p234) target = $region44
        $region43: #{tpu_custom_call.1} parent=39 // pred_region
          %s237 = sand.u32 %s29, 1
          %s238 = scalar_lea.sflag [#allocation3], %s237
          %s239 = sand.u32 %s29, 1
          %s240 = smul.addr %s239, 128
          %s241 = scalar_lea.vmem [#allocation2], %s240
          %s242 = smul.u32 32, %s19
          %s244 = ssub.s32 2048, 2048
          %245 = vsyncadd %s238, %s244
          %s246 = smul.addr %s242, 64
          %s247 = scalar_lea.hbm %s0, %s246
          %s248 = sshll.u32 %s241, 4
          %s249 = int_to_ptr.vmem [resolvable:$true] %s248
          %254 = dma.hbm_to_vmem [thread:$0]  %s247, 2048, %s249, %s238, 64, 64, 4
        $region44: #{tpu_custom_call.1} parent=39 // pred_fallthru
          _
      $region40: #{tpu_custom_call.1} parent=5 // pred_fallthru
        _
      %p255 = scmp.le.s32.totalorder 1, %s19
      %p256 = scmp.lt.s32.totalorder %s19, 3
      %p257 = pnand %p255, %p256
      %p258 = pneg %p257
      // Predicated region
      $region45: #{tpu_custom_call.1} parent=5 // pred_check
        _
      $region46: #{tpu_custom_call.1} parent=5 // pred_check_branch
        %260 = sbr.rel (%p257) target = $region48
      $region47: #{tpu_custom_call.1} parent=5 // pred_region
        %s261 = ssub.s32 %s19, 1
        %s262 = sand.u32 %s32, 1
        %s263 = scalar_lea.sflag [#allocation3], %s262
        %s264 = sand.u32 %s32, 1
        %s265 = smul.addr %s264, 128
        %s266 = scalar_lea.vmem [#allocation2], %s265
        // Predicated region
        $region49: #{tpu_custom_call.1} parent=47 // pred_check
          %p267 = pneg %p45
        $region50: #{tpu_custom_call.1} parent=47 // pred_check_branch
          %269 = sbr.rel (%p267) target = $region52
        $region51: #{tpu_custom_call.1} parent=47 // pred_region
          %270 = dma.done %s263, 2048
        $region52: #{tpu_custom_call.1} parent=47 // pred_fallthru
          _
        %s271 = sand.u32 %s32, 1
        %s272 = scalar_lea.sflag [#allocation3], %s271
        %s273 = sand.u32 %s32, 1
        %s274 = smul.addr %s273, 128
        %s275 = scalar_lea.vmem [#allocation2], %s274
        %p276 = pneg %p45
        %p277 = pneg %p42
        %p278 = pneg %p66
        %p279 = pneg %p63
        %p280 = pneg %p87
        %p281 = pneg %p84
        %p282 = pneg %p108
        %p283 = pneg %p105
        %p284 = pneg %p129
        %p285 = pneg %p126
        %p286 = pneg %p150
        %p287 = pneg %p147
        %p288 = pneg %p171
        %p289 = pneg %p168
        %p290 = pneg %p197
        %p291 = pneg %p194
        %s292 = sand.u32 %s184, 1
        %s293 = scalar_lea.sflag [#allocation4], %s292
        %s294 = sand.u32 %s184, 1
        %s295 = smul.addr %s294, 256
        %s296 = scalar_lea.vmem [#allocation5], %s295
        %s297 = smul.u32 32, %s24
        %s298 = smul.u32 32, %s24
        %v300 = vld [vmem:[%s266] sm:$0xf]
        %v301 = vld [vmem:[%s266 + $0x4] sm:$0xf]
        %v302 = vld [vmem:[%s266 + $0x8] sm:$0xf]
        %v303 = vld [vmem:[%s266 + $0xc] sm:$0xf]
        %v304 = vld [vmem:[%s266 + $0x10] sm:$0xf]
        %v305 = vld [vmem:[%s266 + $0x14] sm:$0xf]
        %v306 = vld [vmem:[%s266 + $0x18] sm:$0xf]
        %v307 = vld [vmem:[%s266 + $0x1c] sm:$0xf]
        %v308 = vld [vmem:[%s266 + $0x20] sm:$0xf]
        %v309 = vld [vmem:[%s266 + $0x24] sm:$0xf]
        %v310 = vld [vmem:[%s266 + $0x28] sm:$0xf]
        %v311 = vld [vmem:[%s266 + $0x2c] sm:$0xf]
        %v312 = vld [vmem:[%s266 + $0x30] sm:$0xf]
        %v313 = vld [vmem:[%s266 + $0x34] sm:$0xf]
        %v314 = vld [vmem:[%s266 + $0x38] sm:$0xf]
        %v315 = vld [vmem:[%s266 + $0x3c] sm:$0xf]
        %v316 = vld [vmem:[%s266 + $0x40] sm:$0xf]
        %v317 = vld [vmem:[%s266 + $0x44] sm:$0xf]
        %v318 = vld [vmem:[%s266 + $0x48] sm:$0xf]
        %v319 = vld [vmem:[%s266 + $0x4c] sm:$0xf]
        %v320 = vld [vmem:[%s266 + $0x50] sm:$0xf]
        %v321 = vld [vmem:[%s266 + $0x54] sm:$0xf]
        %v322 = vld [vmem:[%s266 + $0x58] sm:$0xf]
        %v323 = vld [vmem:[%s266 + $0x5c] sm:$0xf]
        %v324 = vld [vmem:[%s266 + $0x60] sm:$0xf]
        %v325 = vld [vmem:[%s266 + $0x64] sm:$0xf]
        %v326 = vld [vmem:[%s266 + $0x68] sm:$0xf]
        %v327 = vld [vmem:[%s266 + $0x6c] sm:$0xf]
        %v328 = vld [vmem:[%s266 + $0x70] sm:$0xf]
        %v329 = vld [vmem:[%s266 + $0x74] sm:$0xf]
        %v330 = vld [vmem:[%s266 + $0x78] sm:$0xf]
        %v331 = vld [vmem:[%s266 + $0x7c] sm:$0xf]
        %v332 = vld [vmem:[%s1] sm:$0xf]
        %v333 = vld [vmem:[%s1 + $0x4] sm:$0xf]
        %v334 = vld [vmem:[%s1 + $0x8] sm:$0xf]
        %v335 = vld [vmem:[%s1 + $0xc] sm:$0xf]
        %v336 = vld [vmem:[%s1 + $0x10] sm:$0xf]
        %v337 = vld [vmem:[%s1 + $0x14] sm:$0xf]
        %v338 = vld [vmem:[%s1 + $0x18] sm:$0xf]
        %v339 = vld [vmem:[%s1 + $0x1c] sm:$0xf]
        %v340 = vld [vmem:[%s1 + $0x20] sm:$0xf]
        %v341 = vld [vmem:[%s1 + $0x24] sm:$0xf]
        %v342 = vld [vmem:[%s1 + $0x28] sm:$0xf]
        %v343 = vld [vmem:[%s1 + $0x2c] sm:$0xf]
        %v344 = vld [vmem:[%s1 + $0x30] sm:$0xf]
        %v345 = vld [vmem:[%s1 + $0x34] sm:$0xf]
        %v346 = vld [vmem:[%s1 + $0x38] sm:$0xf]
        %v347 = vld [vmem:[%s1 + $0x3c] sm:$0xf]
        %v348 = vld [vmem:[%s2] sm:$0x1]
        %v350 = vlaneseq
        %v351 = vshrl.u32 %v350, 7
        %v352 = vsub.s32 0, %v351
        %v353 = vrot.slane %v348, %v352
        %v387 = vunpack.c.l.b16 %v300
        %v388 = vunpack.c.l.b16 %v301
        %v389 = vunpack.c.l.b16 %v302
        %v390 = vunpack.c.l.b16 %v303
        %v391 = vunpack.c.l.b16 %v304
        %v392 = vunpack.c.l.b16 %v305
        %v393 = vunpack.c.l.b16 %v306
        %v394 = vunpack.c.l.b16 %v307
        %v395 = vunpack.c.l.b16 %v308
        %v396 = vunpack.c.l.b16 %v309
        %v397 = vunpack.c.l.b16 %v310
        %v398 = vunpack.c.l.b16 %v311
        %v399 = vunpack.c.l.b16 %v312
        %v400 = vunpack.c.l.b16 %v313
        %v401 = vunpack.c.l.b16 %v314
        %v402 = vunpack.c.l.b16 %v315
        %v403 = vunpack.c.l.b16 %v316
        %v404 = vunpack.c.l.b16 %v317
        %v405 = vunpack.c.l.b16 %v318
        %v406 = vunpack.c.l.b16 %v319
        %v407 = vunpack.c.l.b16 %v320
        %v408 = vunpack.c.l.b16 %v321
        %v409 = vunpack.c.l.b16 %v322
        %v410 = vunpack.c.l.b16 %v323
        %v411 = vunpack.c.l.b16 %v324
        %v412 = vunpack.c.l.b16 %v325
        %v413 = vunpack.c.l.b16 %v326
        %v414 = vunpack.c.l.b16 %v327
        %v415 = vunpack.c.l.b16 %v328
        %v416 = vunpack.c.l.b16 %v329
        %v417 = vunpack.c.l.b16 %v330
        %v418 = vunpack.c.l.b16 %v331
        %v419 = vpack.c.b16 %v388, %v387
        %v420 = vpack.c.b16 %v390, %v389
        %v421 = vpack.c.b16 %v392, %v391
        %v422 = vpack.c.b16 %v394, %v393
        %v423 = vpack.c.b16 %v396, %v395
        %v424 = vpack.c.b16 %v398, %v397
        %v425 = vpack.c.b16 %v400, %v399
        %v426 = vpack.c.b16 %v402, %v401
        %v427 = vpack.c.b16 %v404, %v403
        %v428 = vpack.c.b16 %v406, %v405
        %v429 = vpack.c.b16 %v408, %v407
        %v430 = vpack.c.b16 %v410, %v409
        %v431 = vpack.c.b16 %v412, %v411
        %v432 = vpack.c.b16 %v414, %v413
        %v433 = vpack.c.b16 %v416, %v415
        %v434 = vpack.c.b16 %v418, %v417
        %v467 = vunpack.c.l.b16 %v332
        %v468 = vunpack.c.l.b16 %v333
        %v469 = vunpack.c.l.b16 %v334
        %v470 = vunpack.c.l.b16 %v335
        %v471 = vunpack.c.l.b16 %v336
        %v472 = vunpack.c.l.b16 %v337
        %v473 = vunpack.c.l.b16 %v338
        %v474 = vunpack.c.l.b16 %v339
        %v475 = vunpack.c.l.b16 %v340
        %v476 = vunpack.c.l.b16 %v341
        %v477 = vunpack.c.l.b16 %v342
        %v478 = vunpack.c.l.b16 %v343
        %v479 = vunpack.c.l.b16 %v344
        %v480 = vunpack.c.l.b16 %v345
        %v481 = vunpack.c.l.b16 %v346
        %v482 = vunpack.c.l.b16 %v347
        %v483 = vpack.c.b16 %v468, %v467
        %v484 = vpack.c.b16 %v470, %v469
        %v485 = vpack.c.b16 %v472, %v471
        %v486 = vpack.c.b16 %v474, %v473
        %v487 = vpack.c.b16 %v476, %v475
        %v488 = vpack.c.b16 %v478, %v477
        %v489 = vpack.c.b16 %v480, %v479
        %v490 = vpack.c.b16 %v482, %v481
        %499 = vmatprep.subr.bf16.mxu0 0
        %500 = vmatpush1.bf16.msra.mxu0 %v483
        %501 = vmatprep.subr.bf16.mxu0 0
        %502 = vmatpush1.bf16.msra.mxu0 %v484
        %503 = vmatprep.subr.bf16.mxu0 0
        %504 = vmatpush1.bf16.msra.mxu0 %v485
        %505 = vmatprep.subr.bf16.mxu0 0
        %506 = vmatpush1.bf16.msra.mxu0 %v486
        %507 = vmatprep.subr.bf16.mxu0 0
        %508 = vmatpush1.bf16.msra.mxu0 %v487
        %509 = vmatprep.subr.bf16.mxu0 0
        %510 = vmatpush1.bf16.msra.mxu0 %v488
        %511 = vmatprep.subr.bf16.mxu0 0
        %512 = vmatpush1.bf16.msra.mxu0 %v489
        %513 = vmatprep.subr.bf16.mxu0 0
        %514 = vmatpush1.bf16.msra.mxu0 %v490
        %515 = vmatprep.subr.bf16.mxu0 0
        %516 = vmatpush1.bf16.msra.mxu0 0
        %517 = vmatprep.subr.bf16.mxu0 0
        %518 = vmatpush1.bf16.msra.mxu0 0
        %519 = vmatprep.subr.bf16.mxu0 0
        %520 = vmatpush1.bf16.msra.mxu0 0
        %521 = vmatprep.subr.bf16.mxu0 0
        %522 = vmatpush1.bf16.msra.mxu0 0
        %523 = vmatprep.subr.bf16.mxu0 0
        %524 = vmatpush1.bf16.msra.mxu0 0
        %525 = vmatprep.subr.bf16.mxu0 0
        %526 = vmatpush1.bf16.msra.mxu0 0
        %527 = vmatprep.subr.bf16.mxu0 0
        %528 = vmatpush1.bf16.msra.mxu0 0
        %529 = vmatprep.subr.bf16.mxu0 0
        %530 = vmatpush1.bf16.msra.mxu0 0
        %531 = vmatprep.mubr.bf16.mxu0 0
        %532 = vmatmul.mubr.bf16.gmra.mrb[0].mxu0 %v419
        %v533 = vpop.f32.mrb[0].mxu0
        %v534 = vadd.f32 %v353, %v533
        %v535 = vpop.f32.mrb[0].mxu0
        %v536 = vpop.f32.mrb[0].mxu0
        %v537 = vadd.f32 %v353, %v536
        %v538 = vpop.f32.mrb[0].mxu0
        %539 = vmatprep.mubr.bf16.mxu0 0
        %540 = vmatmul.mubr.bf16.gmra.mrb[0].mxu0 %v420
        %v541 = vpop.f32.mrb[0].mxu0
        %v542 = vadd.f32 %v353, %v541
        %v543 = vpop.f32.mrb[0].mxu0
        %v544 = vpop.f32.mrb[0].mxu0
        %v545 = vadd.f32 %v353, %v544
        %v546 = vpop.f32.mrb[0].mxu0
        %547 = vmatprep.mubr.bf16.mxu0 0
        %548 = vmatmul.mubr.bf16.gmra.mrb[0].mxu0 %v421
        %v549 = vpop.f32.mrb[0].mxu0
        %v550 = vadd.f32 %v353, %v549
        %v551 = vpop.f32.mrb[0].mxu0
        %v552 = vpop.f32.mrb[0].mxu0
        %v553 = vadd.f32 %v353, %v552
        %v554 = vpop.f32.mrb[0].mxu0
        %555 = vmatprep.mubr.bf16.mxu0 0
        %556 = vmatmul.mubr.bf16.gmra.mrb[0].mxu0 %v422
        %v557 = vpop.f32.mrb[0].mxu0
        %v558 = vadd.f32 %v353, %v557
        %v559 = vpop.f32.mrb[0].mxu0
        %v560 = vpop.f32.mrb[0].mxu0
        %v561 = vadd.f32 %v353, %v560
        %v562 = vpop.f32.mrb[0].mxu0
        %563 = vmatprep.mubr.bf16.mxu0 0
        %564 = vmatmul.mubr.bf16.gmra.mrb[0].mxu0 %v423
        %v565 = vpop.f32.mrb[0].mxu0
        %v566 = vadd.f32 %v353, %v565
        %v567 = vpop.f32.mrb[0].mxu0
        %v568 = vpop.f32.mrb[0].mxu0
        %v569 = vadd.f32 %v353, %v568
        %v570 = vpop.f32.mrb[0].mxu0
        %571 = vmatprep.mubr.bf16.mxu0 0
        %572 = vmatmul.mubr.bf16.gmra.mrb[0].mxu0 %v424
        %v573 = vpop.f32.mrb[0].mxu0
        %v574 = vadd.f32 %v353, %v573
        %v575 = vpop.f32.mrb[0].mxu0
        %v576 = vpop.f32.mrb[0].mxu0
        %v577 = vadd.f32 %v353, %v576
        %v578 = vpop.f32.mrb[0].mxu0
        %579 = vmatprep.mubr.bf16.mxu0 0
        %580 = vmatmul.mubr.bf16.gmra.mrb[0].mxu0 %v425
        %v581 = vpop.f32.mrb[0].mxu0
        %v582 = vadd.f32 %v353, %v581
        %v583 = vpop.f32.mrb[0].mxu0
        %v584 = vpop.f32.mrb[0].mxu0
        %v585 = vadd.f32 %v353, %v584
        %v586 = vpop.f32.mrb[0].mxu0
        %587 = vmatprep.mubr.bf16.mxu0 0
        %588 = vmatmul.mubr.bf16.gmra.mrb[0].mxu0 %v426
        %v589 = vpop.f32.mrb[0].mxu0
        %v590 = vadd.f32 %v353, %v589
        %v591 = vpop.f32.mrb[0].mxu0
        %v592 = vpop.f32.mrb[0].mxu0
        %v593 = vadd.f32 %v353, %v592
        %v594 = vpop.f32.mrb[0].mxu0
        %595 = vmatprep.mubr.bf16.mxu0 0
        %596 = vmatmul.mubr.bf16.gmra.mrb[0].mxu0 %v427
        %v597 = vpop.f32.mrb[0].mxu0
        %v598 = vadd.f32 %v353, %v597
        %v599 = vpop.f32.mrb[0].mxu0
        %v600 = vpop.f32.mrb[0].mxu0
        %v601 = vadd.f32 %v353, %v600
        %v602 = vpop.f32.mrb[0].mxu0
        %603 = vmatprep.mubr.bf16.mxu0 0
        %604 = vmatmul.mubr.bf16.gmra.mrb[0].mxu0 %v428
        %v605 = vpop.f32.mrb[0].mxu0
        %v606 = vadd.f32 %v353, %v605
        %v607 = vpop.f32.mrb[0].mxu0
        %v608 = vpop.f32.mrb[0].mxu0
        %v609 = vadd.f32 %v353, %v608
        %v610 = vpop.f32.mrb[0].mxu0
        %611 = vmatprep.mubr.bf16.mxu0 0
        %612 = vmatmul.mubr.bf16.gmra.mrb[0].mxu0 %v429
        %v613 = vpop.f32.mrb[0].mxu0
        %v614 = vadd.f32 %v353, %v613
        %v615 = vpop.f32.mrb[0].mxu0
        %v616 = vpop.f32.mrb[0].mxu0
        %v617 = vadd.f32 %v353, %v616
        %v618 = vpop.f32.mrb[0].mxu0
        %619 = vmatprep.mubr.bf16.mxu0 0
        %620 = vmatmul.mubr.bf16.gmra.mrb[0].mxu0 %v430
        %v621 = vpop.f32.mrb[0].mxu0
        %v622 = vadd.f32 %v353, %v621
        %v623 = vpop.f32.mrb[0].mxu0
        %v624 = vpop.f32.mrb[0].mxu0
        %v625 = vadd.f32 %v353, %v624
        %v626 = vpop.f32.mrb[0].mxu0
        %627 = vmatprep.mubr.bf16.mxu0 0
        %628 = vmatmul.mubr.bf16.gmra.mrb[0].mxu0 %v431
        %v629 = vpop.f32.mrb[0].mxu0
        %v630 = vadd.f32 %v353, %v629
        %v631 = vpop.f32.mrb[0].mxu0
        %v632 = vpop.f32.mrb[0].mxu0
        %v633 = vadd.f32 %v353, %v632
        %v634 = vpop.f32.mrb[0].mxu0
        %635 = vmatprep.mubr.bf16.mxu0 0
        %636 = vmatmul.mubr.bf16.gmra.mrb[0].mxu0 %v432
        %v637 = vpop.f32.mrb[0].mxu0
        %v638 = vadd.f32 %v353, %v637
        %v639 = vpop.f32.mrb[0].mxu0
        %v640 = vpop.f32.mrb[0].mxu0
        %v641 = vadd.f32 %v353, %v640
        %v642 = vpop.f32.mrb[0].mxu0
        %643 = vmatprep.mubr.bf16.mxu0 0
        %644 = vmatmul.mubr.bf16.gmra.mrb[0].mxu0 %v433
        %v645 = vpop.f32.mrb[0].mxu0
        %v646 = vadd.f32 %v353, %v645
        %v647 = vpop.f32.mrb[0].mxu0
        %v648 = vpop.f32.mrb[0].mxu0
        %v649 = vadd.f32 %v353, %v648
        %v650 = vpop.f32.mrb[0].mxu0
        %651 = vmatprep.mubr.bf16.mxu0 0
        %652 = vmatmul.mubr.bf16.gmra.mrb[0].mxu0 %v434
        %v653 = vpop.f32.mrb[0].mxu0
        %v654 = vadd.f32 %v353, %v653
        %v655 = vpop.f32.mrb[0].mxu0
        %v656 = vpop.f32.mrb[0].mxu0
        %v657 = vadd.f32 %v353, %v656
        %v658 = vpop.f32.mrb[0].mxu0
        %659 = vdwg.mxu0
        %v660 = vmax.f32 %v534, 0.0
        %v661 = vmax.f32 %v537, 0.0
        %v662 = vmax.f32 %v542, 0.0
        %v663 = vmax.f32 %v545, 0.0
        %v664 = vmax.f32 %v550, 0.0
        %v665 = vmax.f32 %v553, 0.0
        %v666 = vmax.f32 %v558, 0.0
        %v667 = vmax.f32 %v561, 0.0
        %v668 = vmax.f32 %v566, 0.0
        %v669 = vmax.f32 %v569, 0.0
        %v670 = vmax.f32 %v574, 0.0
        %v671 = vmax.f32 %v577, 0.0
        %v672 = vmax.f32 %v582, 0.0
        %v673 = vmax.f32 %v585, 0.0
        %v674 = vmax.f32 %v590, 0.0
        %v675 = vmax.f32 %v593, 0.0
        %v676 = vmax.f32 %v598, 0.0
        %v677 = vmax.f32 %v601, 0.0
        %v678 = vmax.f32 %v606, 0.0
        %v679 = vmax.f32 %v609, 0.0
        %v680 = vmax.f32 %v614, 0.0
        %v681 = vmax.f32 %v617, 0.0
        %v682 = vmax.f32 %v622, 0.0
        %v683 = vmax.f32 %v625, 0.0
        %v684 = vmax.f32 %v630, 0.0
        %v685 = vmax.f32 %v633, 0.0
        %v686 = vmax.f32 %v638, 0.0
        %v687 = vmax.f32 %v641, 0.0
        %v688 = vmax.f32 %v646, 0.0
        %v689 = vmax.f32 %v649, 0.0
        %v690 = vmax.f32 %v654, 0.0
        %v691 = vmax.f32 %v657, 0.0
        %v692 = vpack.c.bf16 %v661, %v660
        %v693 = vpack.c.bf16 %v663, %v662
        %v694 = vpack.c.bf16 %v665, %v664
        %v695 = vpack.c.bf16 %v667, %v666
        %v696 = vpack.c.bf16 %v669, %v668
        %v697 = vpack.c.bf16 %v671, %v670
        %v698 = vpack.c.bf16 %v673, %v672
        %v699 = vpack.c.bf16 %v675, %v674
        %v700 = vpack.c.bf16 %v677, %v676
        %v701 = vpack.c.bf16 %v679, %v678
        %v702 = vpack.c.bf16 %v681, %v680
        %v703 = vpack.c.bf16 %v683, %v682
        %v704 = vpack.c.bf16 %v685, %v684
        %v705 = vpack.c.bf16 %v687, %v686
        %v706 = vpack.c.bf16 %v689, %v688
        %v707 = vpack.c.bf16 %v691, %v690
        %v708 = vld [vmem:[%s3] sm:$0xf]
        %v709 = vld [vmem:[%s3 + $0x4] sm:$0xf]
        %v710 = vld [vmem:[%s3 + $0x8] sm:$0xf]
        %v711 = vld [vmem:[%s3 + $0xc] sm:$0xf]
        %v712 = vld [vmem:[%s3 + $0x10] sm:$0xf]
        %v713 = vld [vmem:[%s3 + $0x14] sm:$0xf]
        %v714 = vld [vmem:[%s3 + $0x18] sm:$0xf]
        %v715 = vld [vmem:[%s3 + $0x1c] sm:$0xf]
        %v716 = vld [vmem:[%s4] sm:$0x1]
        %v718 = vlaneseq
        %v719 = vshrl.u32 %v718, 7
        %v720 = vsub.s32 0, %v719
        %v721 = vrot.slane %v716, %v720
        %v731 = vunpack.c.l.b16 %v708
        %v732 = vunpack.c.l.b16 %v709
        %v733 = vunpack.c.l.b16 %v710
        %v734 = vunpack.c.l.b16 %v711
        %v735 = vunpack.c.l.b16 %v712
        %v736 = vunpack.c.l.b16 %v713
        %v737 = vunpack.c.l.b16 %v714
        %v738 = vunpack.c.l.b16 %v715
        %v739 = vpack.c.b16 %v732, %v731
        %v740 = vpack.c.b16 %v734, %v733
        %v741 = vpack.c.b16 %v736, %v735
        %v742 = vpack.c.b16 %v738, %v737
        %vm747 = vcmask 523264
        %v749 = vsel %vm747, %v692, 0
        %v752 = vsel %vm747, %v693, 0
        %v755 = vsel %vm747, %v694, 0
        %v758 = vsel %vm747, %v695, 0
        %v761 = vsel %vm747, %v696, 0
        %v764 = vsel %vm747, %v697, 0
        %v767 = vsel %vm747, %v698, 0
        %v770 = vsel %vm747, %v699, 0
        %v773 = vsel %vm747, %v700, 0
        %v776 = vsel %vm747, %v701, 0
        %v779 = vsel %vm747, %v702, 0
        %v782 = vsel %vm747, %v703, 0
        %v785 = vsel %vm747, %v704, 0
        %v788 = vsel %vm747, %v705, 0
        %v791 = vsel %vm747, %v706, 0
        %v794 = vsel %vm747, %v707, 0
        %796 = vmatprep.subr.bf16.mxu0 0
        %797 = vmatpush1.bf16.msra.mxu0 %v739
        %798 = vmatprep.subr.bf16.mxu0 0
        %799 = vmatpush1.bf16.msra.mxu0 %v740
        %800 = vmatprep.subr.bf16.mxu0 0
        %801 = vmatpush1.bf16.msra.mxu0 %v741
        %802 = vmatprep.subr.bf16.mxu0 0
        %803 = vmatpush1.bf16.msra.mxu0 %v742
        %804 = vmatprep.subr.bf16.mxu0 0
        %805 = vmatpush1.bf16.msra.mxu0 0
        %806 = vmatprep.subr.bf16.mxu0 0
        %807 = vmatpush1.bf16.msra.mxu0 0
        %808 = vmatprep.subr.bf16.mxu0 0
        %809 = vmatpush1.bf16.msra.mxu0 0
        %810 = vmatprep.subr.bf16.mxu0 0
        %811 = vmatpush1.bf16.msra.mxu0 0
        %812 = vmatprep.subr.bf16.mxu0 0
        %813 = vmatpush1.bf16.msra.mxu0 0
        %814 = vmatprep.subr.bf16.mxu0 0
        %815 = vmatpush1.bf16.msra.mxu0 0
        %816 = vmatprep.subr.bf16.mxu0 0
        %817 = vmatpush1.bf16.msra.mxu0 0
        %818 = vmatprep.subr.bf16.mxu0 0
        %819 = vmatpush1.bf16.msra.mxu0 0
        %820 = vmatprep.subr.bf16.mxu0 0
        %821 = vmatpush1.bf16.msra.mxu0 0
        %822 = vmatprep.subr.bf16.mxu0 0
        %823 = vmatpush1.bf16.msra.mxu0 0
        %824 = vmatprep.subr.bf16.mxu0 0
        %825 = vmatpush1.bf16.msra.mxu0 0
        %826 = vmatprep.subr.bf16.mxu0 0
        %827 = vmatpush1.bf16.msra.mxu0 0
        %828 = vmatprep.mubr.bf16.mxu0 0
        %829 = vmatmul.mubr.bf16.gmra.mrb[0].mxu0 %v749
        %v830 = vpop.f32.mrb[0].mxu0
        %v831 = vadd.f32 %v721, %v830
        %v832 = vpop.f32.mrb[0].mxu0
        %v833 = vpop.f32.mrb[0].mxu0
        %v834 = vadd.f32 %v721, %v833
        %v835 = vpop.f32.mrb[0].mxu0
        %836 = vmatprep.mubr.bf16.mxu0 0
        %837 = vmatmul.mubr.bf16.gmra.mrb[0].mxu0 %v752
        %v838 = vpop.f32.mrb[0].mxu0
        %v839 = vadd.f32 %v721, %v838
        %v840 = vpop.f32.mrb[0].mxu0
        %v841 = vpop.f32.mrb[0].mxu0
        %v842 = vadd.f32 %v721, %v841
        %v843 = vpop.f32.mrb[0].mxu0
        %844 = vmatprep.mubr.bf16.mxu0 0
        %845 = vmatmul.mubr.bf16.gmra.mrb[0].mxu0 %v755
        %v846 = vpop.f32.mrb[0].mxu0
        %v847 = vadd.f32 %v721, %v846
        %v848 = vpop.f32.mrb[0].mxu0
        %v849 = vpop.f32.mrb[0].mxu0
        %v850 = vadd.f32 %v721, %v849
        %v851 = vpop.f32.mrb[0].mxu0
        %852 = vmatprep.mubr.bf16.mxu0 0
        %853 = vmatmul.mubr.bf16.gmra.mrb[0].mxu0 %v758
        %v854 = vpop.f32.mrb[0].mxu0
        %v855 = vadd.f32 %v721, %v854
        %v856 = vpop.f32.mrb[0].mxu0
        %v857 = vpop.f32.mrb[0].mxu0
        %v858 = vadd.f32 %v721, %v857
        %v859 = vpop.f32.mrb[0].mxu0
        %860 = vmatprep.mubr.bf16.mxu0 0
        %861 = vmatmul.mubr.bf16.gmra.mrb[0].mxu0 %v761
        %v862 = vpop.f32.mrb[0].mxu0
        %v863 = vadd.f32 %v721, %v862
        %v864 = vpop.f32.mrb[0].mxu0
        %v865 = vpop.f32.mrb[0].mxu0
        %v866 = vadd.f32 %v721, %v865
        %v867 = vpop.f32.mrb[0].mxu0
        %868 = vmatprep.mubr.bf16.mxu0 0
        %869 = vmatmul.mubr.bf16.gmra.mrb[0].mxu0 %v764
        %v870 = vpop.f32.mrb[0].mxu0
        %v871 = vadd.f32 %v721, %v870
        %v872 = vpop.f32.mrb[0].mxu0
        %v873 = vpop.f32.mrb[0].mxu0
        %v874 = vadd.f32 %v721, %v873
        %v875 = vpop.f32.mrb[0].mxu0
        %876 = vmatprep.mubr.bf16.mxu0 0
        %877 = vmatmul.mubr.bf16.gmra.mrb[0].mxu0 %v767
        %v878 = vpop.f32.mrb[0].mxu0
        %v879 = vadd.f32 %v721, %v878
        %v880 = vpop.f32.mrb[0].mxu0
        %v881 = vpop.f32.mrb[0].mxu0
        %v882 = vadd.f32 %v721, %v881
        %v883 = vpop.f32.mrb[0].mxu0
        %884 = vmatprep.mubr.bf16.mxu0 0
        %885 = vmatmul.mubr.bf16.gmra.mrb[0].mxu0 %v770
        %v886 = vpop.f32.mrb[0].mxu0
        %v887 = vadd.f32 %v721, %v886
        %v888 = vpop.f32.mrb[0].mxu0
        %v889 = vpop.f32.mrb[0].mxu0
        %v890 = vadd.f32 %v721, %v889
        %v891 = vpop.f32.mrb[0].mxu0
        %892 = vmatprep.mubr.bf16.mxu0 0
        %893 = vmatmul.mubr.bf16.gmra.mrb[0].mxu0 %v773
        %v894 = vpop.f32.mrb[0].mxu0
        %v895 = vadd.f32 %v721, %v894
        %v896 = vpop.f32.mrb[0].mxu0
        %v897 = vpop.f32.mrb[0].mxu0
        %v898 = vadd.f32 %v721, %v897
        %v899 = vpop.f32.mrb[0].mxu0
        %900 = vmatprep.mubr.bf16.mxu0 0
        %901 = vmatmul.mubr.bf16.gmra.mrb[0].mxu0 %v776
        %v902 = vpop.f32.mrb[0].mxu0
        %v903 = vadd.f32 %v721, %v902
        %v904 = vpop.f32.mrb[0].mxu0
        %v905 = vpop.f32.mrb[0].mxu0
        %v906 = vadd.f32 %v721, %v905
        %v907 = vpop.f32.mrb[0].mxu0
        %908 = vmatprep.mubr.bf16.mxu0 0
        %909 = vmatmul.mubr.bf16.gmra.mrb[0].mxu0 %v779
        %v910 = vpop.f32.mrb[0].mxu0
        %v911 = vadd.f32 %v721, %v910
        %v912 = vpop.f32.mrb[0].mxu0
        %v913 = vpop.f32.mrb[0].mxu0
        %v914 = vadd.f32 %v721, %v913
        %v915 = vpop.f32.mrb[0].mxu0
        %916 = vmatprep.mubr.bf16.mxu0 0
        %917 = vmatmul.mubr.bf16.gmra.mrb[0].mxu0 %v782
        %v918 = vpop.f32.mrb[0].mxu0
        %v919 = vadd.f32 %v721, %v918
        %v920 = vpop.f32.mrb[0].mxu0
        %v921 = vpop.f32.mrb[0].mxu0
        %v922 = vadd.f32 %v721, %v921
        %v923 = vpop.f32.mrb[0].mxu0
        %924 = vmatprep.mubr.bf16.mxu0 0
        %925 = vmatmul.mubr.bf16.gmra.mrb[0].mxu0 %v785
        %v926 = vpop.f32.mrb[0].mxu0
        %v927 = vadd.f32 %v721, %v926
        %v928 = vpop.f32.mrb[0].mxu0
        %v929 = vpop.f32.mrb[0].mxu0
        %v930 = vadd.f32 %v721, %v929
        %v931 = vpop.f32.mrb[0].mxu0
        %932 = vmatprep.mubr.bf16.mxu0 0
        %933 = vmatmul.mubr.bf16.gmra.mrb[0].mxu0 %v788
        %v934 = vpop.f32.mrb[0].mxu0
        %v935 = vadd.f32 %v721, %v934
        %v936 = vpop.f32.mrb[0].mxu0
        %v937 = vpop.f32.mrb[0].mxu0
        %v938 = vadd.f32 %v721, %v937
        %v939 = vpop.f32.mrb[0].mxu0
        %940 = vmatprep.mubr.bf16.mxu0 0
        %941 = vmatmul.mubr.bf16.gmra.mrb[0].mxu0 %v791
        %v942 = vpop.f32.mrb[0].mxu0
        %v943 = vadd.f32 %v721, %v942
        %v944 = vpop.f32.mrb[0].mxu0
        %v945 = vpop.f32.mrb[0].mxu0
        %v946 = vadd.f32 %v721, %v945
        %v947 = vpop.f32.mrb[0].mxu0
        %948 = vmatprep.mubr.bf16.mxu0 0
        %949 = vmatmul.mubr.bf16.gmra.mrb[0].mxu0 %v794
        %v950 = vpop.f32.mrb[0].mxu0
        %v951 = vadd.f32 %v721, %v950
        %v952 = vpop.f32.mrb[0].mxu0
        %v953 = vpop.f32.mrb[0].mxu0
        %v954 = vadd.f32 %v721, %v953
        %v955 = vpop.f32.mrb[0].mxu0
        %956 = vdwg.mxu0
        %v957 = vmax.f32 %v831, 0.0
        %v958 = vmax.f32 %v834, 0.0
        %v959 = vmax.f32 %v839, 0.0
        %v960 = vmax.f32 %v842, 0.0
        %v961 = vmax.f32 %v847, 0.0
        %v962 = vmax.f32 %v850, 0.0
        %v963 = vmax.f32 %v855, 0.0
        %v964 = vmax.f32 %v858, 0.0
        %v965 = vmax.f32 %v863, 0.0
        %v966 = vmax.f32 %v866, 0.0
        %v967 = vmax.f32 %v871, 0.0
        %v968 = vmax.f32 %v874, 0.0
        %v969 = vmax.f32 %v879, 0.0
        %v970 = vmax.f32 %v882, 0.0
        %v971 = vmax.f32 %v887, 0.0
        %v972 = vmax.f32 %v890, 0.0
        %v973 = vmax.f32 %v895, 0.0
        %v974 = vmax.f32 %v898, 0.0
        %v975 = vmax.f32 %v903, 0.0
        %v976 = vmax.f32 %v906, 0.0
        %v977 = vmax.f32 %v911, 0.0
        %v978 = vmax.f32 %v914, 0.0
        %v979 = vmax.f32 %v919, 0.0
        %v980 = vmax.f32 %v922, 0.0
        %v981 = vmax.f32 %v927, 0.0
        %v982 = vmax.f32 %v930, 0.0
        %v983 = vmax.f32 %v935, 0.0
        %v984 = vmax.f32 %v938, 0.0
        %v985 = vmax.f32 %v943, 0.0
        %v986 = vmax.f32 %v946, 0.0
        %v987 = vmax.f32 %v951, 0.0
        %v988 = vmax.f32 %v954, 0.0
        %v989 = vpack.c.bf16 %v958, %v957
        %v990 = vpack.c.bf16 %v960, %v959
        %v991 = vpack.c.bf16 %v962, %v961
        %v992 = vpack.c.bf16 %v964, %v963
        %v993 = vpack.c.bf16 %v966, %v965
        %v994 = vpack.c.bf16 %v968, %v967
        %v995 = vpack.c.bf16 %v970, %v969
        %v996 = vpack.c.bf16 %v972, %v971
        %v997 = vpack.c.bf16 %v974, %v973
        %v998 = vpack.c.bf16 %v976, %v975
        %v999 = vpack.c.bf16 %v978, %v977
        %v1000 = vpack.c.bf16 %v980, %v979
        %v1001 = vpack.c.bf16 %v982, %v981
        %v1002 = vpack.c.bf16 %v984, %v983
        %v1003 = vpack.c.bf16 %v986, %v985
        %v1004 = vpack.c.bf16 %v988, %v987
        %v1005 = vld [vmem:[%s5] sm:$0xf]
        %v1006 = vld [vmem:[%s5 + $0x4] sm:$0xf]
        %v1007 = vld [vmem:[%s5 + $0x8] sm:$0xf]
        %v1008 = vld [vmem:[%s5 + $0xc] sm:$0xf]
        %v1009 = vld [vmem:[%s5 + $0x10] sm:$0xf]
        %v1010 = vld [vmem:[%s5 + $0x14] sm:$0xf]
        %v1011 = vld [vmem:[%s5 + $0x18] sm:$0xf]
        %v1012 = vld [vmem:[%s5 + $0x1c] sm:$0xf]
        %v1013 = vld [vmem:[%s6] sm:$0x1]
        %v1015 = vlaneseq
        %v1016 = vshrl.u32 %v1015, 7
        %v1017 = vsub.s32 0, %v1016
        %v1018 = vrot.slane %v1013, %v1017
        %v1028 = vunpack.c.l.b16 %v1005
        %v1029 = vunpack.c.l.b16 %v1006
        %v1030 = vunpack.c.l.b16 %v1007
        %v1031 = vunpack.c.l.b16 %v1008
        %v1032 = vunpack.c.l.b16 %v1009
        %v1033 = vunpack.c.l.b16 %v1010
        %v1034 = vunpack.c.l.b16 %v1011
        %v1035 = vunpack.c.l.b16 %v1012
        %v1036 = vpack.c.b16 %v1029, %v1028
        %v1037 = vpack.c.b16 %v1031, %v1030
        %v1038 = vpack.c.b16 %v1033, %v1032
        %v1039 = vpack.c.b16 %v1035, %v1034
        %v1045 = vsel %vm747, %v989, 0
        %v1048 = vsel %vm747, %v990, 0
        %v1051 = vsel %vm747, %v991, 0
        %v1054 = vsel %vm747, %v992, 0
        %v1057 = vsel %vm747, %v993, 0
        %v1060 = vsel %vm747, %v994, 0
        %v1063 = vsel %vm747, %v995, 0
        %v1066 = vsel %vm747, %v996, 0
        %v1069 = vsel %vm747, %v997, 0
        %v1072 = vsel %vm747, %v998, 0
        %v1075 = vsel %vm747, %v999, 0
        %v1078 = vsel %vm747, %v1000, 0
        %v1081 = vsel %vm747, %v1001, 0
        %v1084 = vsel %vm747, %v1002, 0
        %v1087 = vsel %vm747, %v1003, 0
        %v1090 = vsel %vm747, %v1004, 0
        %1092 = vmatprep.subr.bf16.mxu0 0
        %1093 = vmatpush1.bf16.msra.mxu0 %v1036
        %1094 = vmatprep.subr.bf16.mxu0 0
        %1095 = vmatpush1.bf16.msra.mxu0 %v1037
        %1096 = vmatprep.subr.bf16.mxu0 0
        %1097 = vmatpush1.bf16.msra.mxu0 %v1038
        %1098 = vmatprep.subr.bf16.mxu0 0
        %1099 = vmatpush1.bf16.msra.mxu0 %v1039
        %1100 = vmatprep.subr.bf16.mxu0 0
        %1101 = vmatpush1.bf16.msra.mxu0 0
        %1102 = vmatprep.subr.bf16.mxu0 0
        %1103 = vmatpush1.bf16.msra.mxu0 0
        %1104 = vmatprep.subr.bf16.mxu0 0
        %1105 = vmatpush1.bf16.msra.mxu0 0
        %1106 = vmatprep.subr.bf16.mxu0 0
        %1107 = vmatpush1.bf16.msra.mxu0 0
        %1108 = vmatprep.subr.bf16.mxu0 0
        %1109 = vmatpush1.bf16.msra.mxu0 0
        %1110 = vmatprep.subr.bf16.mxu0 0
        %1111 = vmatpush1.bf16.msra.mxu0 0
        %1112 = vmatprep.subr.bf16.mxu0 0
        %1113 = vmatpush1.bf16.msra.mxu0 0
        %1114 = vmatprep.subr.bf16.mxu0 0
        %1115 = vmatpush1.bf16.msra.mxu0 0
        %1116 = vmatprep.subr.bf16.mxu0 0
        %1117 = vmatpush1.bf16.msra.mxu0 0
        %1118 = vmatprep.subr.bf16.mxu0 0
        %1119 = vmatpush1.bf16.msra.mxu0 0
        %1120 = vmatprep.subr.bf16.mxu0 0
        %1121 = vmatpush1.bf16.msra.mxu0 0
        %1122 = vmatprep.subr.bf16.mxu0 0
        %1123 = vmatpush1.bf16.msra.mxu0 0
        %1124 = vmatprep.mubr.bf16.mxu0 0
        %1125 = vmatmul.mubr.bf16.gmra.mrb[0].mxu0 %v1045
        %v1126 = vpop.f32.mrb[0].mxu0
        %v1127 = vadd.f32 %v1018, %v1126
        %v1128 = vpop.f32.mrb[0].mxu0
        %v1129 = vpop.f32.mrb[0].mxu0
        %v1130 = vadd.f32 %v1018, %v1129
        %v1131 = vpop.f32.mrb[0].mxu0
        %1132 = vmatprep.mubr.bf16.mxu0 0
        %1133 = vmatmul.mubr.bf16.gmra.mrb[0].mxu0 %v1048
        %v1134 = vpop.f32.mrb[0].mxu0
        %v1135 = vadd.f32 %v1018, %v1134
        %v1136 = vpop.f32.mrb[0].mxu0
        %v1137 = vpop.f32.mrb[0].mxu0
        %v1138 = vadd.f32 %v1018, %v1137
        %v1139 = vpop.f32.mrb[0].mxu0
        %1140 = vmatprep.mubr.bf16.mxu0 0
        %1141 = vmatmul.mubr.bf16.gmra.mrb[0].mxu0 %v1051
        %v1142 = vpop.f32.mrb[0].mxu0
        %v1143 = vadd.f32 %v1018, %v1142
        %v1144 = vpop.f32.mrb[0].mxu0
        %v1145 = vpop.f32.mrb[0].mxu0
        %v1146 = vadd.f32 %v1018, %v1145
        %v1147 = vpop.f32.mrb[0].mxu0
        %1148 = vmatprep.mubr.bf16.mxu0 0
        %1149 = vmatmul.mubr.bf16.gmra.mrb[0].mxu0 %v1054
        %v1150 = vpop.f32.mrb[0].mxu0
        %v1151 = vadd.f32 %v1018, %v1150
        %v1152 = vpop.f32.mrb[0].mxu0
        %v1153 = vpop.f32.mrb[0].mxu0
        %v1154 = vadd.f32 %v1018, %v1153
        %v1155 = vpop.f32.mrb[0].mxu0
        %1156 = vmatprep.mubr.bf16.mxu0 0
        %1157 = vmatmul.mubr.bf16.gmra.mrb[0].mxu0 %v1057
        %v1158 = vpop.f32.mrb[0].mxu0
        %v1159 = vadd.f32 %v1018, %v1158
        %v1160 = vpop.f32.mrb[0].mxu0
        %v1161 = vpop.f32.mrb[0].mxu0
        %v1162 = vadd.f32 %v1018, %v1161
        %v1163 = vpop.f32.mrb[0].mxu0
        %1164 = vmatprep.mubr.bf16.mxu0 0
        %1165 = vmatmul.mubr.bf16.gmra.mrb[0].mxu0 %v1060
        %v1166 = vpop.f32.mrb[0].mxu0
        %v1167 = vadd.f32 %v1018, %v1166
        %v1168 = vpop.f32.mrb[0].mxu0
        %v1169 = vpop.f32.mrb[0].mxu0
        %v1170 = vadd.f32 %v1018, %v1169
        %v1171 = vpop.f32.mrb[0].mxu0
        %1172 = vmatprep.mubr.bf16.mxu0 0
        %1173 = vmatmul.mubr.bf16.gmra.mrb[0].mxu0 %v1063
        %v1174 = vpop.f32.mrb[0].mxu0
        %v1175 = vadd.f32 %v1018, %v1174
        %v1176 = vpop.f32.mrb[0].mxu0
        %v1177 = vpop.f32.mrb[0].mxu0
        %v1178 = vadd.f32 %v1018, %v1177
        %v1179 = vpop.f32.mrb[0].mxu0
        %1180 = vmatprep.mubr.bf16.mxu0 0
        %1181 = vmatmul.mubr.bf16.gmra.mrb[0].mxu0 %v1066
        %v1182 = vpop.f32.mrb[0].mxu0
        %v1183 = vadd.f32 %v1018, %v1182
        %v1184 = vpop.f32.mrb[0].mxu0
        %v1185 = vpop.f32.mrb[0].mxu0
        %v1186 = vadd.f32 %v1018, %v1185
        %v1187 = vpop.f32.mrb[0].mxu0
        %1188 = vmatprep.mubr.bf16.mxu0 0
        %1189 = vmatmul.mubr.bf16.gmra.mrb[0].mxu0 %v1069
        %v1190 = vpop.f32.mrb[0].mxu0
        %v1191 = vadd.f32 %v1018, %v1190
        %v1192 = vpop.f32.mrb[0].mxu0
        %v1193 = vpop.f32.mrb[0].mxu0
        %v1194 = vadd.f32 %v1018, %v1193
        %v1195 = vpop.f32.mrb[0].mxu0
        %1196 = vmatprep.mubr.bf16.mxu0 0
        %1197 = vmatmul.mubr.bf16.gmra.mrb[0].mxu0 %v1072
        %v1198 = vpop.f32.mrb[0].mxu0
        %v1199 = vadd.f32 %v1018, %v1198
        %v1200 = vpop.f32.mrb[0].mxu0
        %v1201 = vpop.f32.mrb[0].mxu0
        %v1202 = vadd.f32 %v1018, %v1201
        %v1203 = vpop.f32.mrb[0].mxu0
        %1204 = vmatprep.mubr.bf16.mxu0 0
        %1205 = vmatmul.mubr.bf16.gmra.mrb[0].mxu0 %v1075
        %v1206 = vpop.f32.mrb[0].mxu0
        %v1207 = vadd.f32 %v1018, %v1206
        %v1208 = vpop.f32.mrb[0].mxu0
        %v1209 = vpop.f32.mrb[0].mxu0
        %v1210 = vadd.f32 %v1018, %v1209
        %v1211 = vpop.f32.mrb[0].mxu0
        %1212 = vmatprep.mubr.bf16.mxu0 0
        %1213 = vmatmul.mubr.bf16.gmra.mrb[0].mxu0 %v1078
        %v1214 = vpop.f32.mrb[0].mxu0
        %v1215 = vadd.f32 %v1018, %v1214
        %v1216 = vpop.f32.mrb[0].mxu0
        %v1217 = vpop.f32.mrb[0].mxu0
        %v1218 = vadd.f32 %v1018, %v1217
        %v1219 = vpop.f32.mrb[0].mxu0
        %1220 = vmatprep.mubr.bf16.mxu0 0
        %1221 = vmatmul.mubr.bf16.gmra.mrb[0].mxu0 %v1081
        %v1222 = vpop.f32.mrb[0].mxu0
        %v1223 = vadd.f32 %v1018, %v1222
        %v1224 = vpop.f32.mrb[0].mxu0
        %v1225 = vpop.f32.mrb[0].mxu0
        %v1226 = vadd.f32 %v1018, %v1225
        %v1227 = vpop.f32.mrb[0].mxu0
        %1228 = vmatprep.mubr.bf16.mxu0 0
        %1229 = vmatmul.mubr.bf16.gmra.mrb[0].mxu0 %v1084
        %v1230 = vpop.f32.mrb[0].mxu0
        %v1231 = vadd.f32 %v1018, %v1230
        %v1232 = vpop.f32.mrb[0].mxu0
        %v1233 = vpop.f32.mrb[0].mxu0
        %v1234 = vadd.f32 %v1018, %v1233
        %v1235 = vpop.f32.mrb[0].mxu0
        %1236 = vmatprep.mubr.bf16.mxu0 0
        %1237 = vmatmul.mubr.bf16.gmra.mrb[0].mxu0 %v1087
        %v1238 = vpop.f32.mrb[0].mxu0
        %v1239 = vadd.f32 %v1018, %v1238
        %v1240 = vpop.f32.mrb[0].mxu0
        %v1241 = vpop.f32.mrb[0].mxu0
        %v1242 = vadd.f32 %v1018, %v1241
        %v1243 = vpop.f32.mrb[0].mxu0
        %1244 = vmatprep.mubr.bf16.mxu0 0
        %1245 = vmatmul.mubr.bf16.gmra.mrb[0].mxu0 %v1090
        %v1246 = vpop.f32.mrb[0].mxu0
        %v1247 = vadd.f32 %v1018, %v1246
        %v1248 = vpop.f32.mrb[0].mxu0
        %v1249 = vpop.f32.mrb[0].mxu0
        %v1250 = vadd.f32 %v1018, %v1249
        %v1251 = vpop.f32.mrb[0].mxu0
        %1252 = vdwg.mxu0
        %1253 = vst [vmem:[%s296] sm:$0xff] %v1127
        %1254 = vst [vmem:[%s296 + $0x8] sm:$0xff] %v1130
        %1255 = vst [vmem:[%s296 + $0x10] sm:$0xff] %v1135
        %1256 = vst [vmem:[%s296 + $0x18] sm:$0xff] %v1138
        %1257 = vst [vmem:[%s296 + $0x20] sm:$0xff] %v1143
        %1258 = vst [vmem:[%s296 + $0x28] sm:$0xff] %v1146
        %1259 = vst [vmem:[%s296 + $0x30] sm:$0xff] %v1151
        %1260 = vst [vmem:[%s296 + $0x38] sm:$0xff] %v1154
        %1261 = vst [vmem:[%s296 + $0x40] sm:$0xff] %v1159
        %1262 = vst [vmem:[%s296 + $0x48] sm:$0xff] %v1162
        %1263 = vst [vmem:[%s296 + $0x50] sm:$0xff] %v1167
        %1264 = vst [vmem:[%s296 + $0x58] sm:$0xff] %v1170
        %1265 = vst [vmem:[%s296 + $0x60] sm:$0xff] %v1175
        %1266 = vst [vmem:[%s296 + $0x68] sm:$0xff] %v1178
        %1267 = vst [vmem:[%s296 + $0x70] sm:$0xff] %v1183
        %1268 = vst [vmem:[%s296 + $0x78] sm:$0xff] %v1186
        %1269 = vst [vmem:[%s296 + $0x80] sm:$0xff] %v1191
        %1270 = vst [vmem:[%s296 + $0x88] sm:$0xff] %v1194
        %1271 = vst [vmem:[%s296 + $0x90] sm:$0xff] %v1199
        %1272 = vst [vmem:[%s296 + $0x98] sm:$0xff] %v1202
        %1273 = vst [vmem:[%s296 + $0xa0] sm:$0xff] %v1207
        %1274 = vst [vmem:[%s296 + $0xa8] sm:$0xff] %v1210
        %1275 = vst [vmem:[%s296 + $0xb0] sm:$0xff] %v1215
        %1276 = vst [vmem:[%s296 + $0xb8] sm:$0xff] %v1218
        %1277 = vst [vmem:[%s296 + $0xc0] sm:$0xff] %v1223
        %1278 = vst [vmem:[%s296 + $0xc8] sm:$0xff] %v1226
        %1279 = vst [vmem:[%s296 + $0xd0] sm:$0xff] %v1231
        %1280 = vst [vmem:[%s296 + $0xd8] sm:$0xff] %v1234
        %1281 = vst [vmem:[%s296 + $0xe0] sm:$0xff] %v1239
        %1282 = vst [vmem:[%s296 + $0xe8] sm:$0xff] %v1242
        %1283 = vst [vmem:[%s296 + $0xf0] sm:$0xff] %v1247
        %1284 = vst [vmem:[%s296 + $0xf8] sm:$0xff] %v1250
        %s1285 = sand.u32 %s184, 1
        %s1286 = scalar_lea.sflag [#allocation4], %s1285
        %s1287 = sand.u32 %s184, 1
        %s1288 = smul.addr %s1287, 256
        %s1289 = scalar_lea.vmem [#allocation5], %s1288
        // Predicated region
        $region53: #{tpu_custom_call.1} parent=47 // pred_check
          %p1290 = pneg %p194
        $region54: #{tpu_custom_call.1} parent=47 // pred_check_branch
          %1292 = sbr.rel (%p1290) target = $region56
        $region55: #{tpu_custom_call.1} parent=47 // pred_region
          %s1293 = smul.u32 32, %s24
          %s1295 = ssub.s32 4096, 4096
          %1296 = vsyncadd %s1286, %s1295
          %s1297 = smul.addr %s1293, 128
          %s1298 = scalar_lea.hbm %s7, %s1297
          %s1299 = sshll.u32 %s1289, 4
          %s1300 = int_to_ptr.vmem [resolvable:$true] %s1299
          %1305 = dma.vmem_to_hbm [thread:$0]  %s1300, 4096, %s1298, %s1286, 128, 128, 8
        $region56: #{tpu_custom_call.1} parent=47 // pred_fallthru
          _
      $region48: #{tpu_custom_call.1} parent=5 // pred_fallthru
        _
      %p1306 = scmp.le.s32.totalorder 2, %s19
      // Predicated region
      $region57: #{tpu_custom_call.1} parent=5 // pred_check
        %p1307 = pneg %p1306
      $region58: #{tpu_custom_call.1} parent=5 // pred_check_branch
        %1309 = sbr.rel (%p1307) target = $region60
      $region59: #{tpu_custom_call.1} parent=5 // pred_region
        %s1310 = ssub.s32 %s19, 2
        // Predicated region
        $region61: #{tpu_custom_call.1} parent=59 // pred_check
          %p1311 = pneg %p200
        $region62: #{tpu_custom_call.1} parent=59 // pred_check_branch
          %1313 = sbr.rel (%p1311) target = $region64
        $region63: #{tpu_custom_call.1} parent=59 // pred_region
          %s1314 = sand.u32 %s185, 1
          %s1315 = scalar_lea.sflag [#allocation4], %s1314
          %s1316 = sand.u32 %s185, 1
          %s1317 = smul.addr %s1316, 256
          %s1318 = scalar_lea.vmem [#allocation5], %s1317
          %1319 = dma.done %s1315, 4096
        $region64: #{tpu_custom_call.1} parent=59 // pred_fallthru
          _
      $region60: #{tpu_custom_call.1} parent=5 // pred_fallthru
        _
    $region6: #{tpu_custom_call.1} parent=1 // loop_footer
      %s23 = sadd.s32 1, %s19
    $region7: #{tpu_custom_call.1} parent=1 // loop_footer_branch
      %18 = sbr.rel target = $region3
    $region8: #{tpu_custom_call.1} parent=1 // loop_exit
      _
    %1320 = vsyncpa [#allocation3], 1
    %s1321 = scalar_lea.sflag [#allocation3], 1
    %1322 = vsyncpa %s1321, 1
    %1323 = vsyncpa [#allocation4], 1
    %s1324 = scalar_lea.sflag [#allocation4], 1
    %1325 = vsyncpa %s1324, 1

</llo_original>
